<compile_context>
chip_gen: v7x
topology: tpu7x:2x2x1
jax: 0.10.0
libtpu: 0.0.40
codegen_flags: <defaults>
</compile_context>

<pallas_src>
import jax
import jax.numpy as jnp
from jax.experimental import pallas as pl
from jax.experimental.pallas import tpu as pltpu

_NEG_FILL = -1e30  # bias fill for padded vocab columns: exp underflows to exactly 0


def _round_up(a, m):
    return (a + m - 1) // m * m


def _cdiv(a, b):
    return -(-a // b)


def _tpu_vmem_and_cores():
    """(VMEM capacity bytes, TensorCores per chip), with conservative fallbacks."""
    vmem, cores = 64 << 20, 1
    try:
        info = pltpu.get_tpu_info()
        vmem = int(getattr(info, "vmem_capacity_bytes", vmem))
        for name in ("num_tensorcores", "tensorcore_count", "num_tensor_cores",
                     "core_count"):
            c = getattr(info, name, None)
            if c:
                cores = int(c)
                break
    except Exception:
        pass
    return vmem, cores


# ---------------------------------------------------------------------------
# Fused single-pass kernel: matmul + online LSE + in-VMEM log-prob finalize.
# Grid = (row tiles [parallel], vocab tiles [arbitrary, reduction last]).
# ---------------------------------------------------------------------------
def _fused_kernel(x_ref, w_ref, b_ref, o_ref, slab, m_sc, l_sc):
    j = pl.program_id(1)
    n_cols = slab.shape[0]      # static
    tv = slab.shape[2]          # static

    @pl.when(j == 0)
    def _init():
        m_sc[...] = jnp.full(m_sc.shape, -jnp.inf, dtype=m_sc.dtype)
        l_sc[...] = jnp.zeros(l_sc.shape, dtype=l_sc.dtype)

    # bf16 x bf16 -> f32 accumulation on the MXU.
    logits = jnp.dot(x_ref[...], w_ref[...], preferred_element_type=jnp.float32)
    logits = logits + b_ref[...]                      # (tm, tv) + (1, tv)

    slab[j] = logits                                  # stash raw logits in VMEM (f32)

    # Online max / sum-exp (flash-softmax style), all in f32.
    m_prev = m_sc[...]
    m_new = jnp.maximum(m_prev, jnp.max(logits, axis=-1, keepdims=True))
    l_sc[...] = (l_sc[...] * jnp.exp(m_prev - m_new)
                 + jnp.sum(jnp.exp(logits - m_new), axis=-1, keepdims=True))
    m_sc[...] = m_new

    @pl.when(j == pl.num_programs(1) - 1)
    def _finalize():
        lse = m_sc[...] + jnp.log(l_sc[...])          # (tm, 1)
        # Static unroll over vocab tiles: lane-dense, 128-aligned static stores into
        # the VMEM-resident output row slab (written back to HBM once per row tile).
        for jj in range(n_cols):
            o_ref[:, jj * tv:(jj + 1) * tv] = (slab[jj] - lse).astype(o_ref.dtype)


# ---------------------------------------------------------------------------
# Two-pass fallback (huge vocab): pass 1 = logits (bf16) + LSE, pass 2 = subtract.
# ---------------------------------------------------------------------------
def _matmul_lse_kernel(x_ref, w_ref, b_ref, logits_ref, lse_ref, m_sc, l_sc):
    j = pl.program_id(1)

    @pl.when(j == 0)
    def _init():
        m_sc[...] = jnp.full(m_sc.shape, -jnp.inf, dtype=m_sc.dtype)
        l_sc[...] = jnp.zeros(l_sc.shape, dtype=l_sc.dtype)

    logits = jnp.dot(x_ref[...], w_ref[...], preferred_element_type=jnp.float32)
    logits = logits + b_ref[...]
    logits_ref[...] = logits.astype(logits_ref.dtype)

    m_prev = m_sc[...]
    m_new = jnp.maximum(m_prev, jnp.max(logits, axis=-1, keepdims=True))
    l_sc[...] = (l_sc[...] * jnp.exp(m_prev - m_new)
                 + jnp.sum(jnp.exp(logits - m_new), axis=-1, keepdims=True))
    m_sc[...] = m_new

    @pl.when(j == pl.num_programs(1) - 1)
    def _finalize():
        lse_ref[...] = m_sc[...] + jnp.log(l_sc[...])


def _sub_lse_kernel(logits_ref, lse_ref, o_ref):
    o_ref[...] = (logits_ref[...].astype(jnp.float32) - lse_ref[...]).astype(o_ref.dtype)


class PredictionLayerTPU:
    """log_softmax(x @ W.T + b, axis=-1)  ==  PyTorch PredictionLayer.forward.

    w_torch: (vocab, d_model) nn.Linear weight;  b: (vocab,).
    Weight cast (bf16) + vocab padding happen ONCE here, not per forward call.
    Precision note: x and W are fed to the MXU in bf16 (f32 accumulation); the
    two-pass fallback additionally stores intermediate logits in bf16.
    """

    def __init__(self, w_torch, b, *, tm=512, tv=1024,
                 compute_dtype=jnp.bfloat16, out_dtype=jnp.float32,
                 interm_dtype=jnp.bfloat16):
        assert tm % 8 == 0 and tv % 128 == 0
        vocab, d_model = w_torch.shape
        assert b.shape == (vocab,)

        self.d_model, self.vocab = int(d_model), int(vocab)
        self.compute_dtype, self.out_dtype, self.interm_dtype = \
            compute_dtype, out_dtype, interm_dtype
        self.tm = tm

        tv_eff = min(tv, _round_up(vocab, 128))
        v_pad = _round_up(vocab, tv_eff)
        self.tv, self.v_pad = tv_eff, v_pad

        # One-time prep: W^T cast + pad; padded bias columns masked with -1e30.
        w = jnp.asarray(w_torch).T                               # (d_model, vocab)
        self.wp = jnp.zeros((d_model, v_pad), compute_dtype).at[:, :vocab].set(
            w.astype(compute_dtype))
        self.bp = jnp.full((1, v_pad), _NEG_FILL, jnp.float32).at[:, :vocab].set(
            jnp.asarray(b, jnp.float32))

        self.vmem_cap, self.num_cores = _tpu_vmem_and_cores()
        self.vmem_budget = int(self.vmem_cap * 0.75)   # ~96 MiB v5e/v6e, ~48 MiB v7x

    # -------------------------------------------------------------------
    def __call__(self, x, *, force_two_pass=False):
        orig_shape = x.shape
        d_model, vocab, v_pad, tv = self.d_model, self.vocab, self.v_pad, self.tv
        assert orig_shape[-1] == d_model

        x2 = x.reshape(-1, d_model)
        n = x2.shape[0]
        n8 = _round_up(max(n, 1), 8)

        cdt_b = jnp.dtype(self.compute_dtype).itemsize
        out_b = jnp.dtype(self.out_dtype).itemsize
        itm_b = jnp.dtype(self.interm_dtype).itemsize

        # Row-tile target: large for W-stream amortization; if >1 TensorCore,
        # make sure there are at least `cores` row tiles so every core gets work.
        tm0 = min(self.tm, n8)
        if self.num_cores > 1 and n8 > 8:
            tm0 = min(tm0, max(8, _round_up(_cdiv(n8, self.num_cores), 8)))

        def fused_need(tm):
            return (2 * tm * d_model * cdt_b       # x tiles (double buffered)
                    + 2 * d_model * tv * cdt_b     # W tiles (streamed, double buffered)
                    + 2 * tv * 4                   # bias tiles
                    + tm * v_pad * 4               # f32 logits slab (scratch, 1 buffer)
                    + 2 * tm * v_pad * out_b       # resident output row slab
                    + 4 * tm * 4)                  # m / l scratch

        def two_pass_need(tm):
            return (2 * tm * d_model * cdt_b
                    + 2 * d_model * tv * cdt_b
                    + 2 * tv * 4
                    + 2 * tm * tv * itm_b          # logits out tiles (bf16)
                    + 2 * tm * 4                   # lse out
                    + 4 * tm * 4)

        def pick_tm(need_fn):
            cand = tm0
            while cand >= 8:
                need = need_fn(cand)
                if int(1.25 * need) <= self.vmem_budget:
                    return cand, need
                if cand == 8:
                    break
                cand = max(8, _round_up(cand // 2, 8))
            return None, None

        use_fused = not force_two_pass
        tm_eff = need = None
        if use_fused:
            tm_eff, need = pick_tm(fused_need)
            use_fused = tm_eff is not None
        if not use_fused:
            tm_eff, need = pick_tm(two_pass_need)
            if tm_eff is None:                     # pathological: let Mosaic decide
                tm_eff = min(tm0, 128)
                need = two_pass_need(tm_eff)

        n_pad = _round_up(n8, tm_eff)
        n_rows = n_pad // tm_eff
        n_cols = v_pad // tv

        def vmem_limit_for(nd):
            return int(min(max(1.25 * nd, 16 << 20),
                           max(self.vmem_budget, 1.1 * nd)))

        vmem_limit = vmem_limit_for(need)

        xp = jnp.zeros((n_pad, d_model), self.compute_dtype).at[:n].set(
            x2.astype(self.compute_dtype))

        if use_fused:
            cost = pl.CostEstimate(
                flops=2 * n_pad * d_model * v_pad,
                transcendentals=n_pad * v_pad,
                bytes_accessed=int(n_pad * d_model * cdt_b
                                   + n_rows * d_model * v_pad * cdt_b
                                   + n_rows * v_pad * 4
                                   + n_pad * v_pad * out_b),
            )
            out = pl.pallas_call(
                _fused_kernel,
                out_shape=jax.ShapeDtypeStruct((n_pad, v_pad), self.out_dtype),
                grid_spec=pltpu.PrefetchScalarGridSpec(
                    num_scalar_prefetch=0,
                    grid=(n_rows, n_cols),          # rows parallel, vocab reduction last
                    in_specs=[
                        pl.BlockSpec((tm_eff, d_model), lambda i, j: (i, 0)),  # x resident over j
                        pl.BlockSpec((d_model, tv), lambda i, j: (0, j)),      # W streamed
                        pl.BlockSpec((1, tv), lambda i, j: (0, j)),            # bias tile
                    ],
                    out_specs=pl.BlockSpec((tm_eff, v_pad), lambda i, j: (i, 0)),  # resident row slab
                    scratch_shapes=[pltpu.VMEM((n_cols, tm_eff, tv), jnp.float32),  # logits slab
                                    pltpu.VMEM((tm_eff, 1), jnp.float32),           # running max
                                    pltpu.VMEM((tm_eff, 1), jnp.float32)],          # running sum-exp
                ),
                compiler_params=pltpu.CompilerParams(
                    dimension_semantics=("parallel", "arbitrary"),
                    vmem_limit_bytes=vmem_limit,
                ),
                cost_estimate=cost,
            )(xp, self.wp, self.bp)
        else:
            # ---------------- two-pass fallback (huge vocab) ----------------
            cost1 = pl.CostEstimate(
                flops=2 * n_pad * d_model * v_pad,
                transcendentals=n_pad * v_pad,
                bytes_accessed=int(n_pad * d_model * cdt_b
                                   + n_rows * d_model * v_pad * cdt_b
                                   + n_rows * v_pad * 4
                                   + n_pad * v_pad * itm_b + n_pad * 4),
            )
            logits, lse = pl.pallas_call(
                _matmul_lse_kernel,
                out_shape=(jax.ShapeDtypeStruct((n_pad, v_pad), self.interm_dtype),
                           jax.ShapeDtypeStruct((n_pad, 1), jnp.float32)),
                grid_spec=pltpu.PrefetchScalarGridSpec(
                    num_scalar_prefetch=0,
                    grid=(n_rows, n_cols),
                    in_specs=[
                        pl.BlockSpec((tm_eff, d_model), lambda i, j: (i, 0)),
                        pl.BlockSpec((d_model, tv), lambda i, j: (0, j)),
                        pl.BlockSpec((1, tv), lambda i, j: (0, j)),
                    ],
                    out_specs=[
                        pl.BlockSpec((tm_eff, tv), lambda i, j: (i, j)),   # bf16 logits
                        pl.BlockSpec((tm_eff, 1), lambda i, j: (i, 0)),    # per-row LSE
                    ],
                    scratch_shapes=[pltpu.VMEM((tm_eff, 1), jnp.float32),
                                    pltpu.VMEM((tm_eff, 1), jnp.float32)],
                ),
                compiler_params=pltpu.CompilerParams(
                    dimension_semantics=("parallel", "arbitrary"),
                    vmem_limit_bytes=vmem_limit,
                ),
                cost_estimate=cost1,
            )(xp, self.wp, self.bp)

            # Pass 2: HBM-bound elementwise. Wider lane-dense vocab tile; overwrite the
            # logits buffer in place when the dtypes match.
            def need2_of(k):
                return 2 * tm_eff * tv * k * (itm_b + out_b) + 2 * tm_eff * 4

            k = max(1, min(4096 // tv, n_cols))
            while k > 1 and (n_cols % k or int(1.25 * need2_of(k)) > self.vmem_budget):
                k -= 1
            tv2 = tv * k
            vmem_limit2 = vmem_limit_for(need2_of(k))
            alias = ({0: 0} if jnp.dtype(self.out_dtype) == jnp.dtype(self.interm_dtype)
                     else {})

            cost2 = pl.CostEstimate(
                flops=n_pad * v_pad,
                transcendentals=0,
                bytes_accessed=int(n_pad * v_pad * (itm_b + out_b) + n_pad * 4),
            )
            out = pl.pallas_call(
                _sub_lse_kernel,
                out_shape=jax.ShapeDtypeStruct((n_pad, v_pad), self.out_dtype),
                grid=(n_rows, n_cols // k),
                in_specs=[
                    pl.BlockSpec((tm_eff, tv2), lambda i, j: (i, j)),
                    pl.BlockSpec((tm_eff, 1), lambda i, j: (i, 0)),
                ],
                out_specs=pl.BlockSpec((tm_eff, tv2), lambda i, j: (i, j)),
                input_output_aliases=alias,
                compiler_params=pltpu.CompilerParams(
                    dimension_semantics=("parallel", "parallel"),
                    vmem_limit_bytes=vmem_limit2,
                ),
                cost_estimate=cost2,
            )(logits, lse)

        out = out[:n, :vocab]
        return out.reshape(*orig_shape[:-1], vocab)


if __name__ == "__main__":
    # Small shapes; S=7 (14 rows) and vocab=1000 exercise ragged row and vocab padding;
    # tv=512 gives 2 vocab tiles so the online-LSE / slab accumulation path is exercised.
    B, S, d_model, vocab = 2, 7, 128, 1000

    key = jax.random.PRNGKey(0)
    kx, kw, kb = jax.random.split(key, 3)

    x = jax.random.normal(kx, (B, S, d_model), dtype=jnp.float32)
    # PyTorch Linear params: W (vocab, d_model), b (vocab,).
    w_torch = jax.random.normal(kw, (vocab, d_model), dtype=jnp.float32) * 0.05
    b_vec = jax.random.normal(kb, (vocab,), dtype=jnp.float32) * 0.05

    # Reference with the same bf16 input rounding the kernel uses (f32 math otherwise).
    xb = x.astype(jnp.bfloat16).astype(jnp.float32)
    wb = w_torch.T.astype(jnp.bfloat16).astype(jnp.float32)
    ref = jax.nn.log_softmax(xb @ wb + b_vec, axis=-1)

    # --- fused single-pass path (default) ---
    layer = PredictionLayerTPU(w_torch, b_vec, tm=512, tv=512)
    out = jax.block_until_ready(layer(x))
    assert out.shape == (B, S, vocab)
    assert bool(jnp.all(jnp.isfinite(out)))
    err = float(jnp.max(jnp.abs(out - ref)))
    assert jnp.allclose(out, ref, atol=1e-3, rtol=1e-3), err

    # --- two-pass fallback path (bf16 intermediate, in-place pass 2 via aliasing) ---
    layer_bf16 = PredictionLayerTPU(w_torch, b_vec, tm=512, tv=512,
                                    out_dtype=jnp.bfloat16)
    out2 = jax.block_until_ready(layer_bf16(x, force_two_pass=True)).astype(jnp.float32)
    assert out2.shape == (B, S, vocab)
    assert bool(jnp.all(jnp.isfinite(out2)))
    err2 = float(jnp.max(jnp.abs(out2 - ref)))
    assert jnp.allclose(out2, ref, atol=5e-2, rtol=2e-2), err2

    print("KERNEL_OK")
</pallas_src>

<mosaic_0001>
module attributes {stable_mosaic.version = 11 : i64} {
  func.func @_fused_kernel(%arg0: i32, %arg1: i32, %arg2: memref<16x128xbf16, #tpu.memory_space<vmem>>, %arg3: memref<128x512xbf16, #tpu.memory_space<vmem>>, %arg4: memref<1x512xf32, #tpu.memory_space<vmem>>, %arg5: memref<16x1024xf32, #tpu.memory_space<vmem>>, %arg6: memref<2x16x512xf32, #tpu.memory_space<vmem>>, %arg7: memref<16x1xf32, #tpu.memory_space<vmem>>, %arg8: memref<16x1xf32, #tpu.memory_space<vmem>>) attributes {dimension_semantics = [#tpu.dimension_semantics<parallel>, #tpu.dimension_semantics<arbitrary>], iteration_bounds = array<i64: 1, 2>, scalar_prefetch = 0 : i64, scratch_operands = 3 : i64, tpu.core_type = #tpu.core_type<tc>, window_params = [{transform_indices = @transform_0, window_bounds = array<i64: 16, 128>}, {transform_indices = @transform_1, window_bounds = array<i64: 128, 512>}, {transform_indices = @transform_2, window_bounds = array<i64: 1, 512>}, {transform_indices = @transform_3, window_bounds = array<i64: 16, 1024>}]} {
    %c0_i32 = arith.constant 0 : i32
    %0 = arith.cmpi eq, %arg1, %c0_i32 : i32
    %1 = arith.extui %0 : i1 to i32
    %c0_i32_0 = arith.constant 0 : i32
    %2 = arith.cmpi ne, %1, %c0_i32_0 : i32
    scf.if %2 {
      %cst_19 = arith.constant 0xFF800000 : f32
      %32 = vector.broadcast %cst_19 : f32 to vector<16x1xf32>
      %c0_20 = arith.constant 0 : index
      %c0_21 = arith.constant 0 : index
      %33 = vector.load %arg7[%c0_20, %c0_21] : memref<16x1xf32, #tpu.memory_space<vmem>>, vector<16x1xf32>
      tpu.vector_store %arg7[%c0_20, %c0_21], %32 {strides = array<i32>} : memref<16x1xf32, #tpu.memory_space<vmem>>, vector<16x1xf32>,
      %cst_22 = arith.constant 0.000000e+00 : f32
      %34 = vector.broadcast %cst_22 : f32 to vector<16x1xf32>
      %c0_23 = arith.constant 0 : index
      %c0_24 = arith.constant 0 : index
      %35 = vector.load %arg8[%c0_23, %c0_24] : memref<16x1xf32, #tpu.memory_space<vmem>>, vector<16x1xf32>
      tpu.vector_store %arg8[%c0_23, %c0_24], %34 {strides = array<i32>} : memref<16x1xf32, #tpu.memory_space<vmem>>, vector<16x1xf32>,
    } else {
    }
    %c0 = arith.constant 0 : index
    %c0_1 = arith.constant 0 : index
    %3 = vector.load %arg2[%c0, %c0_1] : memref<16x128xbf16, #tpu.memory_space<vmem>>, vector<16x128xbf16>
    %c0_2 = arith.constant 0 : index
    %c0_3 = arith.constant 0 : index
    %4 = vector.load %arg3[%c0_2, %c0_3] : memref<128x512xbf16, #tpu.memory_space<vmem>>, vector<128x512xbf16>
    %cst = arith.constant dense<0.000000e+00> : vector<16x512xf32>
    %5 = tpu.matmul %3, %4, %cst {dimension_numbers = #tpu.dot_dimension_numbers<[1], [0], [0], [1], [0, 0, 1, 1], [], []>} : vector<16x128xbf16>, vector<128x512xbf16>, vector<16x512xf32> -> vector<16x512xf32>
    %c0_4 = arith.constant 0 : index
    %c0_5 = arith.constant 0 : index
    %6 = vector.load %arg4[%c0_4, %c0_5] : memref<1x512xf32, #tpu.memory_space<vmem>>, vector<1x512xf32>
    %7 = vector.broadcast %6 : vector<1x512xf32> to vector<16x512xf32>
    %8 = arith.addf %5, %7 : vector<16x512xf32>
    %9 = arith.index_cast %arg1 : i32 to index
    %c0_6 = arith.constant 0 : index
    %c0_7 = arith.constant 0 : index
    %10 = vector.load %arg6[%9, %c0_6, %c0_7] : memref<2x16x512xf32, #tpu.memory_space<vmem>>, vector<1x16x512xf32>
    %11 = vector.shape_cast %10 : vector<1x16x512xf32> to vector<16x512xf32>
    %12 = vector.shape_cast %8 : vector<16x512xf32> to vector<1x16x512xf32>
    tpu.vector_store %arg6[%9, %c0_6, %c0_7], %12 {strides = array<i32>} : memref<2x16x512xf32, #tpu.memory_space<vmem>>, vector<1x16x512xf32>,
    %c0_8 = arith.constant 0 : index
    %c0_9 = arith.constant 0 : index
    %13 = vector.load %arg7[%c0_8, %c0_9] : memref<16x1xf32, #tpu.memory_space<vmem>>, vector<16x1xf32>
    %cst_10 = arith.constant dense<0xFF800000> : vector<16xf32>
    %14 = vector.multi_reduction <maximumf>, %8, %cst_10 [1] : vector<16x512xf32> to vector<16xf32>
    %15 = vector.shape_cast %14 : vector<16xf32> to vector<16x1xf32>
    %16 = arith.maximumf %13, %15 : vector<16x1xf32>
    %c0_11 = arith.constant 0 : index
    %c0_12 = arith.constant 0 : index
    %17 = vector.load %arg8[%c0_11, %c0_12] : memref<16x1xf32, #tpu.memory_space<vmem>>, vector<16x1xf32>
    %18 = arith.subf %13, %16 : vector<16x1xf32>
    %19 = math.exp %18 : vector<16x1xf32>
    %20 = arith.mulf %17, %19 : vector<16x1xf32>
    %21 = vector.broadcast %16 : vector<16x1xf32> to vector<16x512xf32>
    %22 = arith.subf %8, %21 : vector<16x512xf32>
    %23 = math.exp %22 : vector<16x512xf32>
    %cst_13 = arith.constant dense<0.000000e+00> : vector<16xf32>
    %24 = vector.multi_reduction <add>, %23, %cst_13 [1] : vector<16x512xf32> to vector<16xf32>
    %25 = vector.shape_cast %24 : vector<16xf32> to vector<16x1xf32>
    %26 = arith.addf %20, %25 : vector<16x1xf32>
    %c0_14 = arith.constant 0 : index
    %c0_15 = arith.constant 0 : index
    %27 = vector.load %arg8[%c0_14, %c0_15] : memref<16x1xf32, #tpu.memory_space<vmem>>, vector<16x1xf32>
    tpu.vector_store %arg8[%c0_14, %c0_15], %26 {strides = array<i32>} : memref<16x1xf32, #tpu.memory_space<vmem>>, vector<16x1xf32>,
    %c0_16 = arith.constant 0 : index
    %c0_17 = arith.constant 0 : index
    %28 = vector.load %arg7[%c0_16, %c0_17] : memref<16x1xf32, #tpu.memory_space<vmem>>, vector<16x1xf32>
    tpu.vector_store %arg7[%c0_16, %c0_17], %16 {strides = array<i32>} : memref<16x1xf32, #tpu.memory_space<vmem>>, vector<16x1xf32>,
    %c1_i32 = arith.constant 1 : i32
    %29 = arith.cmpi eq, %arg1, %c1_i32 : i32
    %30 = arith.extui %29 : i1 to i32
    %c0_i32_18 = arith.constant 0 : i32
    %31 = arith.cmpi ne, %30, %c0_i32_18 : i32
    scf.if %31 {
      %c0_19 = arith.constant 0 : index
      %c0_20 = arith.constant 0 : index
      %32 = vector.load %arg7[%c0_19, %c0_20] : memref<16x1xf32, #tpu.memory_space<vmem>>, vector<16x1xf32>
      %c0_21 = arith.constant 0 : index
      %c0_22 = arith.constant 0 : index
      %33 = vector.load %arg8[%c0_21, %c0_22] : memref<16x1xf32, #tpu.memory_space<vmem>>, vector<16x1xf32>
      %34 = math.log %33 : vector<16x1xf32>
      %35 = arith.addf %32, %34 : vector<16x1xf32>
      %c0_23 = arith.constant 0 : index
      %c0_24 = arith.constant 0 : index
      %c0_25 = arith.constant 0 : index
      %36 = vector.load %arg6[%c0_23, %c0_24, %c0_25] : memref<2x16x512xf32, #tpu.memory_space<vmem>>, vector<1x16x512xf32>
      %37 = vector.shape_cast %36 : vector<1x16x512xf32> to vector<16x512xf32>
      %38 = vector.broadcast %35 : vector<16x1xf32> to vector<16x512xf32>
      %39 = arith.subf %37, %38 : vector<16x512xf32>
      %c0_26 = arith.constant 0 : index
      %c0_27 = arith.constant 0 : index
      %40 = vector.load %arg5[%c0_26, %c0_27] : memref<16x1024xf32, #tpu.memory_space<vmem>>, vector<16x512xf32>
      tpu.vector_store %arg5[%c0_26, %c0_27], %39 {strides = array<i32>} : memref<16x1024xf32, #tpu.memory_space<vmem>>, vector<16x512xf32>,
      %c1 = arith.constant 1 : index
      %c0_28 = arith.constant 0 : index
      %c0_29 = arith.constant 0 : index
      %41 = vector.load %arg6[%c1, %c0_28, %c0_29] : memref<2x16x512xf32, #tpu.memory_space<vmem>>, vector<1x16x512xf32>
      %42 = vector.shape_cast %41 : vector<1x16x512xf32> to vector<16x512xf32>
      %43 = vector.broadcast %35 : vector<16x1xf32> to vector<16x512xf32>
      %44 = arith.subf %42, %43 : vector<16x512xf32>
      %c0_30 = arith.constant 0 : index
      %c512 = arith.constant 512 : index
      %45 = vector.load %arg5[%c0_30, %c512] : memref<16x1024xf32, #tpu.memory_space<vmem>>, vector<16x512xf32>
      tpu.vector_store %arg5[%c0_30, %c512], %44 {strides = array<i32>} : memref<16x1024xf32, #tpu.memory_space<vmem>>, vector<16x512xf32>,
    } else {
    }
    return
  }
  func.func @transform_0(%arg0: i32, %arg1: i32) -> (i32, i32) {
    %c0_i32 = arith.constant 0 : i32
    %c0_i32_0 = arith.constant 0 : i32
    return %arg0, %c0_i32 : i32, i32
  }
  func.func @transform_1(%arg0: i32, %arg1: i32) -> (i32, i32) {
    %c0_i32 = arith.constant 0 : i32
    %c0_i32_0 = arith.constant 0 : i32
    return %c0_i32, %arg1 : i32, i32
  }
  func.func @transform_2(%arg0: i32, %arg1: i32) -> (i32, i32) {
    %c0_i32 = arith.constant 0 : i32
    %c0_i32_0 = arith.constant 0 : i32
    return %c0_i32, %arg1 : i32, i32
  }
  func.func @transform_3(%arg0: i32, %arg1: i32) -> (i32, i32) {
    %c0_i32 = arith.constant 0 : i32
    %c0_i32_0 = arith.constant 0 : i32
    return %arg0, %c0_i32 : i32, i32
  }
}

</mosaic_0001>

<llo_original>
// kernel: tpu_custom_call.1
$region0: #{tpu_custom_call.1}
  #allocation0 [shape = 'u32[]', space=smem, size = 0x4, offset = 0x4, fixed_abs, tag = 'smem constant byte address 0x4 - core index']
  #allocation1 [shape = 'u32[144,128]{1,0:T(1,128)}', space=vmem, size = 0x12000, scoped, tag = 'internal scratch']
  #allocation2 [shape = 'f32[2,16,512]{2,1,0:T(8,128)}', space=vmem, size = 0x10000, scoped, tag = 'scratch operand']
  #allocation3 [shape = 'f32[16,1]{1,0:T(8,128)}', space=vmem, size = 0x2000, scoped, tag = 'scratch operand']
  #allocation4 [shape = 'f32[16,1]{1,0:T(8,128)}', space=vmem, size = 0x2000, scoped, tag = 'scratch operand']
  %s0 = inlined_call_operand.hbm [shape: bf16[16,128], index: 0, kind: input, shape index: {}]
  %s1 = inlined_call_operand.hbm [shape: bf16[128,1024], index: 1, kind: input, shape index: {}]
  %s2 = inlined_call_operand.hbm [shape: f32[1,1024], index: 2, kind: input, shape index: {}]
  %s3 = inlined_call_operand.hbm [shape: f32[16,1024], index: 3, kind: output, shape index: {}]
  %s4 = sld [smem:[#allocation0]]
  $region65: #{tpu_custom_call.1} parent=0
    _
  %s6 = ssub.s32 1, %s4
  %s7 = scalar_select 0, %s6, %s4
  $region1: #{tpu_custom_call.1} parent=0
    #allocation5 [shape = 'u8[4096]{0}', space=vmem, size = 0x1000, scoped, tag = 'input window, operand 0, single buffered']
    #allocation6 [shape = 's32[2]{0}', space=sflag, size = 0x8, scoped, tag = 'scoped memory for tpu_custom_call.1']
    #allocation7 [shape = 's32[2]{0}', space=sflag, size = 0x8, scoped, tag = 'scoped memory for tpu_custom_call.1']
    #allocation8 [shape = 'u8[262144]{0}', space=vmem, size = 0x40000, scoped, tag = 'input window, operand 1']
    #allocation9 [shape = 's32[2]{0}', space=sflag, size = 0x8, scoped, tag = 'scoped memory for tpu_custom_call.1']
    #allocation10 [shape = 'u8[4096]{0}', space=vmem, size = 0x1000, scoped, tag = 'input window, operand 2']
    #allocation11 [shape = 'u8[65536]{0}', space=vmem, size = 0x10000, scoped, tag = 'output window, operand 0, single buffered']
    %8 = vsyncpa [#allocation6], 0
    %9 = vsyncpa [#allocation9], 0
    %s10 = scalar_lea.sflag [#allocation9], 1
    %11 = vsyncpa %s10, 0
    %12 = vsyncpa [#allocation7], 0
    loop: start=0, step=1, limit=4
    $region2: #{tpu_custom_call.1} parent=1 // loop_pre_header
      _
    $region3: #{tpu_custom_call.1} parent=1 // loop_header
      %s14 = sphi 0, %s18
      %p15 = scmp.ge.s32.totalorder %s14, 4
      %s21 = sphi 0, %s33
      %s22 = sphi 0, %s29
      %s23 = sphi 0, %s21
      %s24 = sphi 0, %s22
      %s25 = sphi 0, %s23
      %s26 = sphi 0, %s24
      %s36 = sphi 0, %s38
      %s39 = sphi 0, %s36
      %s40 = sphi 0, %s39
      %s56 = sphi 0, %s40
      %s62 = sphi 0, %s64
      %s65 = sphi 0, %s62
      %s66 = sphi 0, %s65
      %s82 = sphi 0, %s66
      %s88 = sphi 0, %s90
      %s91 = sphi 0, %s88
      %s92 = sphi 0, %s91
      %s108 = sphi 0, %s92
      %s114 = sphi 0, %s116
      %s117 = sphi 0, %s114
      %s118 = sphi 0, %s117
      %s134 = sphi 0, %s118
    $region4: #{tpu_custom_call.1} parent=1 // loop_header_branch
      %17 = sbr.rel (%p15) target = $region8
    $region5: #{tpu_custom_call.1} parent=1 // loop_body
      %s19 = ssub.s32 %s14, 1
      %s20 = ssub.s32 %s14, 2
      %s27 = sadd.s32 1, %s22
      %p28 = scmp.ge.s32.totalorder %s27, 2
      %s29 = scalar_select %p28, 0, %s27
      %s30 = sadd.s32 1, %s21
      %s31 = scalar_select %p28, %s30, %s21
      %p32 = scmp.ge.s32.totalorder %s31, 1
      %s33 = scalar_select %p32, 0, %s31
      %s34 = ssub.s32 %s21, %s33
      %p35 = scmp.eq.s32.totalorder %s34, 0
      %s37 = sadd.s32 %s36, 1
      %s38 = scalar_select %p35, %s36, %s37
      %p41 = pneg %p35
      %p42 = scmp.eq.s32.totalorder %s14, 1
      %p43 = por %p41, %p42
      %p44 = scmp.ne.s32.totalorder %s36, %s39
      %p45 = scmp.eq.s32.totalorder %s14, 0
      %p46 = por %p44, %p45
      %p47 = scmp.ne.s32.totalorder %s36, %s39
      %p48 = scmp.eq.s32.totalorder %s19, 1
      %p49 = por %p47, %p48
      %p50 = scmp.ne.s32.totalorder %s39, %s40
      %p51 = scmp.eq.s32.totalorder %s19, 0
      %p52 = por %p50, %p51
      %p53 = scmp.ne.s32.totalorder %s39, %s40
      %p54 = scmp.eq.s32.totalorder %s20, 1
      %p55 = por %p53, %p54
      %p57 = scmp.ne.s32.totalorder %s40, %s56
      %p58 = scmp.eq.s32.totalorder %s20, 0
      %p59 = por %p57, %p58
      %s60 = ssub.s32 %s22, %s29
      %p61 = scmp.eq.s32.totalorder %s60, 0
      %s63 = sadd.s32 %s62, 1
      %s64 = scalar_select %p61, %s62, %s63
      %p67 = pneg %p61
      %p68 = scmp.eq.s32.totalorder %s14, 1
      %p69 = por %p67, %p68
      %p70 = scmp.ne.s32.totalorder %s62, %s65
      %p71 = scmp.eq.s32.totalorder %s14, 0
      %p72 = por %p70, %p71
      %p73 = scmp.ne.s32.totalorder %s62, %s65
      %p74 = scmp.eq.s32.totalorder %s19, 1
      %p75 = por %p73, %p74
      %p76 = scmp.ne.s32.totalorder %s65, %s66
      %p77 = scmp.eq.s32.totalorder %s19, 0
      %p78 = por %p76, %p77
      %p79 = scmp.ne.s32.totalorder %s65, %s66
      %p80 = scmp.eq.s32.totalorder %s20, 1
      %p81 = por %p79, %p80
      %p83 = scmp.ne.s32.totalorder %s66, %s82
      %p84 = scmp.eq.s32.totalorder %s20, 0
      %p85 = por %p83, %p84
      %s86 = ssub.s32 %s22, %s29
      %p87 = scmp.eq.s32.totalorder %s86, 0
      %s89 = sadd.s32 %s88, 1
      %s90 = scalar_select %p87, %s88, %s89
      %p93 = pneg %p87
      %p94 = scmp.eq.s32.totalorder %s14, 1
      %p95 = por %p93, %p94
      %p96 = scmp.ne.s32.totalorder %s88, %s91
      %p97 = scmp.eq.s32.totalorder %s14, 0
      %p98 = por %p96, %p97
      %p99 = scmp.ne.s32.totalorder %s88, %s91
      %p100 = scmp.eq.s32.totalorder %s19, 1
      %p101 = por %p99, %p100
      %p102 = scmp.ne.s32.totalorder %s91, %s92
      %p103 = scmp.eq.s32.totalorder %s19, 0
      %p104 = por %p102, %p103
      %p105 = scmp.ne.s32.totalorder %s91, %s92
      %p106 = scmp.eq.s32.totalorder %s20, 1
      %p107 = por %p105, %p106
      %p109 = scmp.ne.s32.totalorder %s92, %s108
      %p110 = scmp.eq.s32.totalorder %s20, 0
      %p111 = por %p109, %p110
      %s112 = ssub.s32 %s21, %s33
      %p113 = scmp.eq.s32.totalorder %s112, 0
      %s115 = sadd.s32 %s114, 1
      %s116 = scalar_select %p113, %s114, %s115
      %p119 = pneg %p113
      %p120 = scmp.eq.s32.totalorder %s14, 1
      %p121 = por %p119, %p120
      %p122 = scmp.ne.s32.totalorder %s114, %s117
      %p123 = scmp.eq.s32.totalorder %s14, 0
      %p124 = por %p122, %p123
      %p125 = scmp.ne.s32.totalorder %s114, %s117
      %p126 = scmp.eq.s32.totalorder %s19, 1
      %p127 = por %p125, %p126
      %p128 = scmp.ne.s32.totalorder %s117, %s118
      %p129 = scmp.eq.s32.totalorder %s19, 0
      %p130 = por %p128, %p129
      %p131 = scmp.ne.s32.totalorder %s117, %s118
      %p132 = scmp.eq.s32.totalorder %s20, 1
      %p133 = por %p131, %p132
      %p135 = scmp.ne.s32.totalorder %s118, %s134
      %p136 = scmp.eq.s32.totalorder %s20, 0
      %p137 = por %p135, %p136
      %p138 = scmp.le.s32.totalorder 1, %s14
      %p139 = scmp.lt.s32.totalorder %s14, 3
      %p140 = pnand %p138, %p139
      %p141 = pneg %p140
      // Predicated region
      $region9: #{tpu_custom_call.1} parent=5 // pred_check
        _
      $region10: #{tpu_custom_call.1} parent=5 // pred_check_branch
        %143 = sbr.rel (%p140) target = $region12
      $region11: #{tpu_custom_call.1} parent=5 // pred_region
        %s144 = ssub.s32 %s14, 1
        // Predicated region
        $region13: #{tpu_custom_call.1} parent=11 // pred_check
          %p145 = pneg %p52
        $region14: #{tpu_custom_call.1} parent=11 // pred_check_branch
          %147 = sbr.rel (%p145) target = $region16
        $region15: #{tpu_custom_call.1} parent=11 // pred_region
          %s148 = smul.u32 2, %s23
          %s150 = ssub.s32 128, 128
          %151 = vsyncadd [#allocation6], %s150
          %s152 = smul.addr %s148, 64
          %s153 = scalar_lea.hbm %s0, %s152
          %s154 = sshll.u32 [#allocation5], 4
          %s155 = int_to_ptr.vmem [resolvable:$true] %s154
          %160 = dma.hbm_to_vmem [thread:$0]  %s153, 128, %s155, [#allocation6], 64, 64, 4
        $region16: #{tpu_custom_call.1} parent=11 // pred_fallthru
          _
      $region12: #{tpu_custom_call.1} parent=5 // pred_fallthru
        _
      %p161 = scmp.lt.s32.totalorder %s14, 2
      // Predicated region
      $region17: #{tpu_custom_call.1} parent=5 // pred_check
        %p162 = pneg %p161
      $region18: #{tpu_custom_call.1} parent=5 // pred_check_branch
        %164 = sbr.rel (%p162) target = $region20
      $region19: #{tpu_custom_call.1} parent=5 // pred_region
        // Predicated region
        $region21: #{tpu_custom_call.1} parent=19 // pred_check
          %p165 = pneg %p72
        $region22: #{tpu_custom_call.1} parent=19 // pred_check_branch
          %167 = sbr.rel (%p165) target = $region24
        $region23: #{tpu_custom_call.1} parent=19 // pred_region
          %s168 = sand.u32 %s14, 1
          %s169 = scalar_lea.sflag [#allocation9], %s168
          %s170 = sand.u32 %s62, 1
          %s171 = smul.addr %s170, 256
          %s172 = scalar_lea.vmem [#allocation8], %s171
          %s173 = smul.u32 4, %s22
          %s175 = ssub.s32 4096, 4096
          %176 = vsyncadd %s169, %s175
          %s177 = smul.addr %s173, 64
          %s178 = scalar_lea.hbm %s1, %s177
          %s179 = sshll.u32 %s172, 4
          %s180 = int_to_ptr.vmem [resolvable:$true] %s179
          %185 = dma.hbm_to_vmem [thread:$0]  %s178, 4096, %s180, %s169, 512, 256, 16
        $region24: #{tpu_custom_call.1} parent=19 // pred_fallthru
          _
        // Predicated region
        $region25: #{tpu_custom_call.1} parent=19 // pred_check
          %p186 = pneg %p98
        $region26: #{tpu_custom_call.1} parent=19 // pred_check_branch
          %188 = sbr.rel (%p186) target = $region28
        $region27: #{tpu_custom_call.1} parent=19 // pred_region
          %s189 = sand.u32 %s14, 1
          %s190 = scalar_lea.sflag [#allocation9], %s189
          %s191 = sand.u32 %s88, 1
          %s192 = smul.addr %s191, 4
          %s193 = scalar_lea.vmem [#allocation10], %s192
          %s194 = smul.u32 4, %s22
          %s196 = ssub.s32 64, 64
          %197 = vsyncadd %s190, %s196
          %s198 = smul.addr %s194, 16
          %s199 = scalar_lea.hbm %s2, %s198
          %s201 = sshll.u32 %s193, 4
          %s202 = int_to_ptr.vmem [resolvable:$true] %s201
          %204 = dma.hbm_to_vmem [thread:$0]  %s199, 64, %s202, %s190
        $region28: #{tpu_custom_call.1} parent=19 // pred_fallthru
          _
      $region20: #{tpu_custom_call.1} parent=5 // pred_fallthru
        _
      %p205 = scmp.le.s32.totalorder 1, %s14
      %p206 = scmp.lt.s32.totalorder %s14, 3
      %p207 = pnand %p205, %p206
      %p208 = pneg %p207
      // Predicated region
      $region29: #{tpu_custom_call.1} parent=5 // pred_check
        _
      $region30: #{tpu_custom_call.1} parent=5 // pred_check_branch
        %210 = sbr.rel (%p207) target = $region32
      $region31: #{tpu_custom_call.1} parent=5 // pred_region
        %s211 = ssub.s32 %s14, 1
        // Predicated region
        $region33: #{tpu_custom_call.1} parent=31 // pred_check
          %p212 = pneg %p52
        $region34: #{tpu_custom_call.1} parent=31 // pred_check_branch
          %214 = sbr.rel (%p212) target = $region36
        $region35: #{tpu_custom_call.1} parent=31 // pred_region
          %215 = dma.done [#allocation6], 128
        $region36: #{tpu_custom_call.1} parent=31 // pred_fallthru
          _
        %s216 = sand.u32 %s19, 1
        %s217 = scalar_lea.sflag [#allocation9], %s216
        %s218 = sand.u32 %s65, 1
        %s219 = smul.addr %s218, 256
        %s220 = scalar_lea.vmem [#allocation8], %s219
        // Predicated region
        $region37: #{tpu_custom_call.1} parent=31 // pred_check
          %p221 = pneg %p78
        $region38: #{tpu_custom_call.1} parent=31 // pred_check_branch
          %223 = sbr.rel (%p221) target = $region40
        $region39: #{tpu_custom_call.1} parent=31 // pred_region
          %224 = dma.done %s217, 4096
        $region40: #{tpu_custom_call.1} parent=31 // pred_fallthru
          _
        %s225 = sand.u32 %s19, 1
        %s226 = scalar_lea.sflag [#allocation9], %s225
        %s227 = sand.u32 %s91, 1
        %s228 = smul.addr %s227, 4
        %s229 = scalar_lea.vmem [#allocation10], %s228
        // Predicated region
        $region41: #{tpu_custom_call.1} parent=31 // pred_check
          %p230 = pneg %p104
        $region42: #{tpu_custom_call.1} parent=31 // pred_check_branch
          %232 = sbr.rel (%p230) target = $region44
        $region43: #{tpu_custom_call.1} parent=31 // pred_region
          %233 = dma.done %s226, 64
        $region44: #{tpu_custom_call.1} parent=31 // pred_fallthru
          _
        %p234 = pneg %p52
        %p235 = pneg %p49
        %s236 = sand.u32 %s19, 1
        %s237 = scalar_lea.sflag [#allocation9], %s236
        %s238 = sand.u32 %s65, 1
        %s239 = smul.addr %s238, 256
        %s240 = scalar_lea.vmem [#allocation8], %s239
        %p241 = pneg %p78
        %p242 = pneg %p75
        %s243 = sand.u32 %s19, 1
        %s244 = scalar_lea.sflag [#allocation9], %s243
        %s245 = sand.u32 %s91, 1
        %s246 = smul.addr %s245, 4
        %s247 = scalar_lea.vmem [#allocation10], %s246
        %p248 = pneg %p104
        %p249 = pneg %p101
        %p250 = pneg %p130
        %p251 = pneg %p127
        %s252 = smul.u32 2, %s23
        %s253 = smul.u32 4, %s24
        %s254 = smul.u32 4, %s24
        %s255 = smul.u32 2, %s23
        %p257 = scmp.eq.s32.totalorder %s24, 0
        // Predicated region
        $region45: #{tpu_custom_call.1} parent=31 // pred_check
          %p258 = pneg %p257
        $region46: #{tpu_custom_call.1} parent=31 // pred_check_branch
          %260 = sbr.rel (%p258) target = $region48
        $region47: #{tpu_custom_call.1} parent=31 // pred_region
          %vm261 = vcmask 7168
          %262 = vst.msk [vmem:[#allocation3] sm:$0xff] %vm261, -inf
          %263 = vst.msk [vmem:[#allocation3 + $0x8] sm:$0xff] %vm261, -inf
          %264 = vst.msk [vmem:[#allocation4] sm:$0xff] %vm261, 0.0
          %265 = vst.msk [vmem:[#allocation4 + $0x8] sm:$0xff] %vm261, 0.0
        $region48: #{tpu_custom_call.1} parent=31 // pred_fallthru
          _
        %v266 = vld [vmem:[#allocation5] sm:$0xf]
        %v267 = vld [vmem:[#allocation5 + $0x4] sm:$0xf]
        %v268 = vld [vmem:[%s220] sm:$0xff]
        %v269 = vld [vmem:[%s220 + $0x8] sm:$0xff]
        %v270 = vld [vmem:[%s220 + $0x10] sm:$0xff]
        %v271 = vld [vmem:[%s220 + $0x18] sm:$0xff]
        %v272 = vld [vmem:[%s220 + $0x20] sm:$0xff]
        %v273 = vld [vmem:[%s220 + $0x28] sm:$0xff]
        %v274 = vld [vmem:[%s220 + $0x30] sm:$0xff]
        %v275 = vld [vmem:[%s220 + $0x38] sm:$0xff]
        %v276 = vld [vmem:[%s220 + $0x40] sm:$0xff]
        %v277 = vld [vmem:[%s220 + $0x48] sm:$0xff]
        %v278 = vld [vmem:[%s220 + $0x50] sm:$0xff]
        %v279 = vld [vmem:[%s220 + $0x58] sm:$0xff]
        %v280 = vld [vmem:[%s220 + $0x60] sm:$0xff]
        %v281 = vld [vmem:[%s220 + $0x68] sm:$0xff]
        %v282 = vld [vmem:[%s220 + $0x70] sm:$0xff]
        %v283 = vld [vmem:[%s220 + $0x78] sm:$0xff]
        %v284 = vld [vmem:[%s220 + $0x80] sm:$0xff]
        %v285 = vld [vmem:[%s220 + $0x88] sm:$0xff]
        %v286 = vld [vmem:[%s220 + $0x90] sm:$0xff]
        %v287 = vld [vmem:[%s220 + $0x98] sm:$0xff]
        %v288 = vld [vmem:[%s220 + $0xa0] sm:$0xff]
        %v289 = vld [vmem:[%s220 + $0xa8] sm:$0xff]
        %v290 = vld [vmem:[%s220 + $0xb0] sm:$0xff]
        %v291 = vld [vmem:[%s220 + $0xb8] sm:$0xff]
        %v292 = vld [vmem:[%s220 + $0xc0] sm:$0xff]
        %v293 = vld [vmem:[%s220 + $0xc8] sm:$0xff]
        %v294 = vld [vmem:[%s220 + $0xd0] sm:$0xff]
        %v295 = vld [vmem:[%s220 + $0xd8] sm:$0xff]
        %v296 = vld [vmem:[%s220 + $0xe0] sm:$0xff]
        %v297 = vld [vmem:[%s220 + $0xe8] sm:$0xff]
        %v298 = vld [vmem:[%s220 + $0xf0] sm:$0xff]
        %v299 = vld [vmem:[%s220 + $0xf8] sm:$0xff]
        %v300 = vld [vmem:[%s229] sm:$0xf]
        %v302 = vlaneseq
        %v303 = vshrl.u32 %v302, 7
        %v304 = vsub.s32 0, %v303
        %v305 = vrot.slane %v300, %v304
        %v306 = vlaneseq
        %v307 = vshrl.u32 %v306, 7
        %v308 = vsub.s32 1, %v307
        %v309 = vrot.slane %v300, %v308
        %v310 = vlaneseq
        %v311 = vshrl.u32 %v310, 7
        %v312 = vsub.s32 2, %v311
        %v313 = vrot.slane %v300, %v312
        %v314 = vlaneseq
        %v315 = vshrl.u32 %v314, 7
        %v316 = vsub.s32 3, %v315
        %v317 = vrot.slane %v300, %v316
        %v324 = vunpack.c.l.b16 %v266
        %v325 = vunpack.c.l.b16 %v267
        %v326 = vpack.c.b16 %v325, %v324
        %v360 = vunpack.c.l.b16 %v268
        %v361 = vunpack.c.h.b16 %v268
        %v362 = vunpack.c.l.b16 %v269
        %v363 = vunpack.c.h.b16 %v269
        %v364 = vunpack.c.l.b16 %v270
        %v365 = vunpack.c.h.b16 %v270
        %v366 = vunpack.c.l.b16 %v271
        %v367 = vunpack.c.h.b16 %v271
        %v368 = vunpack.c.l.b16 %v272
        %v369 = vunpack.c.h.b16 %v272
        %v370 = vunpack.c.l.b16 %v273
        %v371 = vunpack.c.h.b16 %v273
        %v372 = vunpack.c.l.b16 %v274
        %v373 = vunpack.c.h.b16 %v274
        %v374 = vunpack.c.l.b16 %v275
        %v375 = vunpack.c.h.b16 %v275
        %v376 = vunpack.c.l.b16 %v276
        %v377 = vunpack.c.h.b16 %v276
        %v378 = vunpack.c.l.b16 %v277
        %v379 = vunpack.c.h.b16 %v277
        %v380 = vunpack.c.l.b16 %v278
        %v381 = vunpack.c.h.b16 %v278
        %v382 = vunpack.c.l.b16 %v279
        %v383 = vunpack.c.h.b16 %v279
        %v384 = vunpack.c.l.b16 %v280
        %v385 = vunpack.c.h.b16 %v280
        %v386 = vunpack.c.l.b16 %v281
        %v387 = vunpack.c.h.b16 %v281
        %v388 = vunpack.c.l.b16 %v282
        %v389 = vunpack.c.h.b16 %v282
        %v390 = vunpack.c.l.b16 %v283
        %v391 = vunpack.c.h.b16 %v283
        %v392 = vunpack.c.l.b16 %v284
        %v393 = vunpack.c.h.b16 %v284
        %v394 = vunpack.c.l.b16 %v285
        %v395 = vunpack.c.h.b16 %v285
        %v396 = vunpack.c.l.b16 %v286
        %v397 = vunpack.c.h.b16 %v286
        %v398 = vunpack.c.l.b16 %v287
        %v399 = vunpack.c.h.b16 %v287
        %v400 = vunpack.c.l.b16 %v288
        %v401 = vunpack.c.h.b16 %v288
        %v402 = vunpack.c.l.b16 %v289
        %v403 = vunpack.c.h.b16 %v289
        %v404 = vunpack.c.l.b16 %v290
        %v405 = vunpack.c.h.b16 %v290
        %v406 = vunpack.c.l.b16 %v291
        %v407 = vunpack.c.h.b16 %v291
        %v408 = vunpack.c.l.b16 %v292
        %v409 = vunpack.c.h.b16 %v292
        %v410 = vunpack.c.l.b16 %v293
        %v411 = vunpack.c.h.b16 %v293
        %v412 = vunpack.c.l.b16 %v294
        %v413 = vunpack.c.h.b16 %v294
        %v414 = vunpack.c.l.b16 %v295
        %v415 = vunpack.c.h.b16 %v295
        %v416 = vunpack.c.l.b16 %v296
        %v417 = vunpack.c.h.b16 %v296
        %v418 = vunpack.c.l.b16 %v297
        %v419 = vunpack.c.h.b16 %v297
        %v420 = vunpack.c.l.b16 %v298
        %v421 = vunpack.c.h.b16 %v298
        %v422 = vunpack.c.l.b16 %v299
        %v423 = vunpack.c.h.b16 %v299
        %v424 = vpack.c.b16 %v364, %v360
        %v425 = vpack.c.b16 %v365, %v361
        %v426 = vpack.c.b16 %v366, %v362
        %v427 = vpack.c.b16 %v367, %v363
        %v428 = vpack.c.b16 %v372, %v368
        %v429 = vpack.c.b16 %v373, %v369
        %v430 = vpack.c.b16 %v374, %v370
        %v431 = vpack.c.b16 %v375, %v371
        %v432 = vpack.c.b16 %v380, %v376
        %v433 = vpack.c.b16 %v381, %v377
        %v434 = vpack.c.b16 %v382, %v378
        %v435 = vpack.c.b16 %v383, %v379
        %v436 = vpack.c.b16 %v388, %v384
        %v437 = vpack.c.b16 %v389, %v385
        %v438 = vpack.c.b16 %v390, %v386
        %v439 = vpack.c.b16 %v391, %v387
        %v440 = vpack.c.b16 %v396, %v392
        %v441 = vpack.c.b16 %v397, %v393
        %v442 = vpack.c.b16 %v398, %v394
        %v443 = vpack.c.b16 %v399, %v395
        %v444 = vpack.c.b16 %v404, %v400
        %v445 = vpack.c.b16 %v405, %v401
        %v446 = vpack.c.b16 %v406, %v402
        %v447 = vpack.c.b16 %v407, %v403
        %v448 = vpack.c.b16 %v412, %v408
        %v449 = vpack.c.b16 %v413, %v409
        %v450 = vpack.c.b16 %v414, %v410
        %v451 = vpack.c.b16 %v415, %v411
        %v452 = vpack.c.b16 %v420, %v416
        %v453 = vpack.c.b16 %v421, %v417
        %v454 = vpack.c.b16 %v422, %v418
        %v455 = vpack.c.b16 %v423, %v419
        %488 = vmatprep.subr.bf16.mxu0 %v425
        %489 = vmatpush1.bf16.msra.mxu0 %v424
        %490 = vmatprep.subr.bf16.mxu0 %v429
        %491 = vmatpush1.bf16.msra.mxu0 %v428
        %492 = vmatprep.subr.bf16.mxu0 %v433
        %493 = vmatpush1.bf16.msra.mxu0 %v432
        %494 = vmatprep.subr.bf16.mxu0 %v437
        %495 = vmatpush1.bf16.msra.mxu0 %v436
        %496 = vmatprep.subr.bf16.mxu0 %v441
        %497 = vmatpush1.bf16.msra.mxu0 %v440
        %498 = vmatprep.subr.bf16.mxu0 %v445
        %499 = vmatpush1.bf16.msra.mxu0 %v444
        %500 = vmatprep.subr.bf16.mxu0 %v449
        %501 = vmatpush1.bf16.msra.mxu0 %v448
        %502 = vmatprep.subr.bf16.mxu0 %v453
        %503 = vmatpush1.bf16.msra.mxu0 %v452
        %504 = vmatprep.subr.bf16.mxu0 0
        %505 = vmatpush1.bf16.msra.mxu0 0
        %506 = vmatprep.subr.bf16.mxu0 0
        %507 = vmatpush1.bf16.msra.mxu0 0
        %508 = vmatprep.subr.bf16.mxu0 0
        %509 = vmatpush1.bf16.msra.mxu0 0
        %510 = vmatprep.subr.bf16.mxu0 0
        %511 = vmatpush1.bf16.msra.mxu0 0
        %512 = vmatprep.subr.bf16.mxu0 0
        %513 = vmatpush1.bf16.msra.mxu0 0
        %514 = vmatprep.subr.bf16.mxu0 0
        %515 = vmatpush1.bf16.msra.mxu0 0
        %516 = vmatprep.subr.bf16.mxu0 0
        %517 = vmatpush1.bf16.msra.mxu0 0
        %518 = vmatprep.subr.bf16.mxu0 0
        %519 = vmatpush1.bf16.msra.mxu0 0
        %520 = vmatprep.mubr.bf16.mxu0 0
        %521 = vmatmul.mubr.bf16.gmra.mrb[0].mxu0 %v326
        %v522 = vpop.f32.mrb[0].mxu0
        %v523 = vadd.f32 %v305, %v522
        %v524 = vpop.f32.mrb[0].mxu0
        %v525 = vadd.f32 %v309, %v524
        %v526 = vpop.f32.mrb[0].mxu0
        %v527 = vadd.f32 %v305, %v526
        %v528 = vpop.f32.mrb[0].mxu0
        %v529 = vadd.f32 %v309, %v528
        %530 = vdwg.mxu0
        %531 = vmatprep.subr.bf16.mxu0 %v427
        %532 = vmatpush1.bf16.msra.mxu0 %v426
        %533 = vmatprep.subr.bf16.mxu0 %v431
        %534 = vmatpush1.bf16.msra.mxu0 %v430
        %535 = vmatprep.subr.bf16.mxu0 %v435
        %536 = vmatpush1.bf16.msra.mxu0 %v434
        %537 = vmatprep.subr.bf16.mxu0 %v439
        %538 = vmatpush1.bf16.msra.mxu0 %v438
        %539 = vmatprep.subr.bf16.mxu0 %v443
        %540 = vmatpush1.bf16.msra.mxu0 %v442
        %541 = vmatprep.subr.bf16.mxu0 %v447
        %542 = vmatpush1.bf16.msra.mxu0 %v446
        %543 = vmatprep.subr.bf16.mxu0 %v451
        %544 = vmatpush1.bf16.msra.mxu0 %v450
        %545 = vmatprep.subr.bf16.mxu0 %v455
        %546 = vmatpush1.bf16.msra.mxu0 %v454
        %547 = vmatprep.subr.bf16.mxu0 0
        %548 = vmatpush1.bf16.msra.mxu0 0
        %549 = vmatprep.subr.bf16.mxu0 0
        %550 = vmatpush1.bf16.msra.mxu0 0
        %551 = vmatprep.subr.bf16.mxu0 0
        %552 = vmatpush1.bf16.msra.mxu0 0
        %553 = vmatprep.subr.bf16.mxu0 0
        %554 = vmatpush1.bf16.msra.mxu0 0
        %555 = vmatprep.subr.bf16.mxu0 0
        %556 = vmatpush1.bf16.msra.mxu0 0
        %557 = vmatprep.subr.bf16.mxu0 0
        %558 = vmatpush1.bf16.msra.mxu0 0
        %559 = vmatprep.subr.bf16.mxu0 0
        %560 = vmatpush1.bf16.msra.mxu0 0
        %561 = vmatprep.subr.bf16.mxu0 0
        %562 = vmatpush1.bf16.msra.mxu0 0
        %563 = vmatprep.mubr.bf16.mxu0 0
        %564 = vmatmul.mubr.bf16.gmra.mrb[0].mxu0 %v326
        %v565 = vpop.f32.mrb[0].mxu0
        %v566 = vadd.f32 %v313, %v565
        %v567 = vpop.f32.mrb[0].mxu0
        %v568 = vadd.f32 %v317, %v567
        %v569 = vpop.f32.mrb[0].mxu0
        %v570 = vadd.f32 %v313, %v569
        %v571 = vpop.f32.mrb[0].mxu0
        %v572 = vadd.f32 %v317, %v571
        %573 = vdwg.mxu0
        %s574 = smul.u32 %s24, 8
        %s575 = smul.addr %s574, 8
        %s576 = scalar_lea.vmem [#allocation2], %s575
        %577 = vst [vmem:[%s576] sm:$0xff] %v523
        %578 = vst [vmem:[%s576 + $0x8] sm:$0xff] %v525
        %579 = vst [vmem:[%s576 + $0x10] sm:$0xff] %v566
        %580 = vst [vmem:[%s576 + $0x18] sm:$0xff] %v568
        %581 = vst [vmem:[%s576 + $0x20] sm:$0xff] %v527
        %582 = vst [vmem:[%s576 + $0x28] sm:$0xff] %v529
        %583 = vst [vmem:[%s576 + $0x30] sm:$0xff] %v570
        %584 = vst [vmem:[%s576 + $0x38] sm:$0xff] %v572
        %v585 = vld [vmem:[#allocation3] sm:$0xff]
        %v586 = vld [vmem:[#allocation3 + $0x8] sm:$0xff]
        %v587 = vmax.f32 %v523, %v566
        %v588 = vmax.f32 %v525, %v568
        %v589 = vmax.f32 %v587, %v588
        %590 = vmax.xlane.f32.xlu0 %v589
        %v591 = vpop.xlane.xlu0 %590
        %v592 = vmax.f32 %v527, %v570
        %v593 = vmax.f32 %v529, %v572
        %v594 = vmax.f32 %v592, %v593
        %595 = vmax.xlane.f32.xlu0 %v594
        %v596 = vpop.xlane.xlu0 %595
        %v597 = vmax.f32 %v585, %v591
        %v598 = vmax.f32 %v586, %v596
        %v599 = vld [vmem:[#allocation4] sm:$0xff]
        %v600 = vld [vmem:[#allocation4 + $0x8] sm:$0xff]
        %v601 = vsub.f32 %v585, %v597
        %v602 = vsub.f32 %v586, %v598
        %v603 = vmul.f32 %v601, 1.442695
        %v604 = vpow.pop %v603
        %v605 = vmul.f32 %v602, 1.442695
        %v606 = vpow.pop %v605
        %v607 = vmul.f32 %v599, %v604
        %v608 = vmul.f32 %v600, %v606
        %610 = vset.pattern.permute.xlu0 0
        %611 = vperm.xlu0 %610, %v597
        %v612 = vpop.permute.xlu0 %611
        %615 = vset.pattern.permute.xlu0 0
        %616 = vperm.xlu0 %615, %v598
        %v617 = vpop.permute.xlu0 %616
        %v619 = vsub.f32 %v523, %v612
        %v620 = vsub.f32 %v525, %v612
        %v621 = vsub.f32 %v566, %v612
        %v622 = vsub.f32 %v568, %v612
        %v623 = vsub.f32 %v527, %v617
        %v624 = vsub.f32 %v529, %v617
        %v625 = vsub.f32 %v570, %v617
        %v626 = vsub.f32 %v572, %v617
        %v627 = vmul.f32 %v619, 1.442695
        %v628 = vpow.pop %v627
        %v629 = vmul.f32 %v620, 1.442695
        %v630 = vpow.pop %v629
        %v631 = vmul.f32 %v621, 1.442695
        %v632 = vpow.pop %v631
        %v633 = vmul.f32 %v622, 1.442695
        %v634 = vpow.pop %v633
        %v635 = vmul.f32 %v623, 1.442695
        %v636 = vpow.pop %v635
        %v637 = vmul.f32 %v624, 1.442695
        %v638 = vpow.pop %v637
        %v639 = vmul.f32 %v625, 1.442695
        %v640 = vpow.pop %v639
        %v641 = vmul.f32 %v626, 1.442695
        %v642 = vpow.pop %v641
        %v643 = vadd.f32 %v628, %v630
        %v644 = vadd.f32 %v643, %v632
        %v645 = vadd.f32 %v644, %v634
        %646 = vadd.xlane.f32.xlu0 %v645
        %v647 = vpop.xlane.xlu0 %646
        %v648 = vadd.f32 %v636, %v638
        %v649 = vadd.f32 %v648, %v640
        %v650 = vadd.f32 %v649, %v642
        %651 = vadd.xlane.f32.xlu0 %v650
        %v652 = vpop.xlane.xlu0 %651
        %v653 = vadd.f32 %v607, %v647
        %v654 = vadd.f32 %v608, %v652
        %vm655 = vcmask 7168
        %656 = vst.msk [vmem:[#allocation4] sm:$0xff] %vm655, %v653
        %657 = vst.msk [vmem:[#allocation4 + $0x8] sm:$0xff] %vm655, %v654
        %658 = vst.msk [vmem:[#allocation3] sm:$0xff] %vm655, %v597
        %659 = vst.msk [vmem:[#allocation3 + $0x8] sm:$0xff] %vm655, %v598
        %p660 = scmp.eq.s32.totalorder %s24, 1
        // Predicated region
        $region49: #{tpu_custom_call.1} parent=31 // pred_check
          %p661 = pneg %p660
        $region50: #{tpu_custom_call.1} parent=31 // pred_check_branch
          %663 = sbr.rel (%p661) target = $region52
        $region51: #{tpu_custom_call.1} parent=31 // pred_region
          %v664 = vld [vmem:[#allocation3] sm:$0xff]
          %v665 = vld [vmem:[#allocation3 + $0x8] sm:$0xff]
          %v666 = vld [vmem:[#allocation4] sm:$0xff]
          %v667 = vld [vmem:[#allocation4 + $0x8] sm:$0xff]
          %v668 = vlog2.pop %v666
          %v669 = vmul.f32 %v668, 0.6931472
          %v670 = vlog2.pop %v667
          %v671 = vmul.f32 %v670, 0.6931472
          %v672 = vadd.f32 %v664, %v669
          %v673 = vadd.f32 %v665, %v671
          %v674 = vld [vmem:[#allocation2] sm:$0xff]
          %v675 = vld [vmem:[#allocation2 + $0x8] sm:$0xff]
          %v676 = vld [vmem:[#allocation2 + $0x10] sm:$0xff]
          %v677 = vld [vmem:[#allocation2 + $0x18] sm:$0xff]
          %v678 = vld [vmem:[#allocation2 + $0x20] sm:$0xff]
          %v679 = vld [vmem:[#allocation2 + $0x28] sm:$0xff]
          %v680 = vld [vmem:[#allocation2 + $0x30] sm:$0xff]
          %v681 = vld [vmem:[#allocation2 + $0x38] sm:$0xff]
          %683 = vset.pattern.permute.xlu0 0
          %684 = vperm.xlu0 %683, %v672
          %v685 = vpop.permute.xlu0 %684
          %688 = vset.pattern.permute.xlu0 0
          %689 = vperm.xlu0 %688, %v673
          %v690 = vpop.permute.xlu0 %689
          %v692 = vsub.f32 %v674, %v685
          %v693 = vsub.f32 %v675, %v685
          %v694 = vsub.f32 %v676, %v685
          %v695 = vsub.f32 %v677, %v685
          %v696 = vsub.f32 %v678, %v690
          %v697 = vsub.f32 %v679, %v690
          %v698 = vsub.f32 %v680, %v690
          %v699 = vsub.f32 %v681, %v690
          %700 = vst [vmem:[#allocation11] sm:$0xff] %v692
          %701 = vst [vmem:[#allocation11 + $0x8] sm:$0xff] %v693
          %702 = vst [vmem:[#allocation11 + $0x10] sm:$0xff] %v694
          %703 = vst [vmem:[#allocation11 + $0x18] sm:$0xff] %v695
          %704 = vst [vmem:[#allocation11 + $0x40] sm:$0xff] %v696
          %705 = vst [vmem:[#allocation11 + $0x48] sm:$0xff] %v697
          %706 = vst [vmem:[#allocation11 + $0x50] sm:$0xff] %v698
          %707 = vst [vmem:[#allocation11 + $0x58] sm:$0xff] %v699
          %s708 = scalar_lea.vmem [#allocation2], 64
          %v709 = vld [vmem:[%s708] sm:$0xff]
          %v710 = vld [vmem:[%s708 + $0x8] sm:$0xff]
          %v711 = vld [vmem:[%s708 + $0x10] sm:$0xff]
          %v712 = vld [vmem:[%s708 + $0x18] sm:$0xff]
          %v713 = vld [vmem:[%s708 + $0x20] sm:$0xff]
          %v714 = vld [vmem:[%s708 + $0x28] sm:$0xff]
          %v715 = vld [vmem:[%s708 + $0x30] sm:$0xff]
          %v716 = vld [vmem:[%s708 + $0x38] sm:$0xff]
          %v717 = vsub.f32 %v709, %v685
          %v718 = vsub.f32 %v710, %v685
          %v719 = vsub.f32 %v711, %v685
          %v720 = vsub.f32 %v712, %v685
          %v721 = vsub.f32 %v713, %v690
          %v722 = vsub.f32 %v714, %v690
          %v723 = vsub.f32 %v715, %v690
          %v724 = vsub.f32 %v716, %v690
          %725 = vst [vmem:[#allocation11 + $0x20] sm:$0xff] %v717
          %726 = vst [vmem:[#allocation11 + $0x28] sm:$0xff] %v718
          %727 = vst [vmem:[#allocation11 + $0x30] sm:$0xff] %v719
          %728 = vst [vmem:[#allocation11 + $0x38] sm:$0xff] %v720
          %729 = vst [vmem:[#allocation11 + $0x60] sm:$0xff] %v721
          %730 = vst [vmem:[#allocation11 + $0x68] sm:$0xff] %v722
          %731 = vst [vmem:[#allocation11 + $0x70] sm:$0xff] %v723
          %732 = vst [vmem:[#allocation11 + $0x78] sm:$0xff] %v724
        $region52: #{tpu_custom_call.1} parent=31 // pred_fallthru
          _
        // Predicated region
        $region53: #{tpu_custom_call.1} parent=31 // pred_check
          %p733 = pneg %p127
        $region54: #{tpu_custom_call.1} parent=31 // pred_check_branch
          %735 = sbr.rel (%p733) target = $region56
        $region55: #{tpu_custom_call.1} parent=31 // pred_region
          %s736 = smul.u32 2, %s23
          %s738 = ssub.s32 2048, 2048
          %739 = vsyncadd [#allocation7], %s738
          %s740 = smul.addr %s736, 8
          %s741 = smul.addr %s740, 128
          %s742 = scalar_lea.hbm %s3, %s741
          %s743 = sshll.u32 [#allocation11], 4
          %s744 = int_to_ptr.vmem [resolvable:$true] %s743
          %749 = dma.vmem_to_hbm [thread:$0]  %s744, 2048, %s742, [#allocation7], 1024, 1024, 64
        $region56: #{tpu_custom_call.1} parent=31 // pred_fallthru
          _
        // Predicated region
        $region57: #{tpu_custom_call.1} parent=31 // pred_check
          %p750 = pneg %p127
        $region58: #{tpu_custom_call.1} parent=31 // pred_check_branch
          %752 = sbr.rel (%p750) target = $region60
        $region59: #{tpu_custom_call.1} parent=31 // pred_region
          %753 = dma.done [#allocation7], 2048
        $region60: #{tpu_custom_call.1} parent=31 // pred_fallthru
          _
      $region32: #{tpu_custom_call.1} parent=5 // pred_fallthru
        _
      %p754 = scmp.le.s32.totalorder 2, %s14
      // Predicated region
      $region61: #{tpu_custom_call.1} parent=5 // pred_check
        %p755 = pneg %p754
      $region62: #{tpu_custom_call.1} parent=5 // pred_check_branch
        %757 = sbr.rel (%p755) target = $region64
      $region63: #{tpu_custom_call.1} parent=5 // pred_region
        %s758 = ssub.s32 %s14, 2
      $region64: #{tpu_custom_call.1} parent=5 // pred_fallthru
        _
    $region6: #{tpu_custom_call.1} parent=1 // loop_footer
      %s18 = sadd.s32 1, %s14
    $region7: #{tpu_custom_call.1} parent=1 // loop_footer_branch
      %13 = sbr.rel target = $region3
    $region8: #{tpu_custom_call.1} parent=1 // loop_exit
      _
    %759 = vsyncpa [#allocation6], 1
    %s760 = scalar_lea.sflag [#allocation6], 1
    %761 = vsyncpa %s760, 1
    %762 = vsyncpa [#allocation9], 1
    %s763 = scalar_lea.sflag [#allocation9], 1
    %764 = vsyncpa %s763, 1
    %765 = vsyncpa [#allocation7], 1
    %s766 = scalar_lea.sflag [#allocation7], 1
    %767 = vsyncpa %s766, 1

</llo_original>
